<compile_context>
chip_gen: v7x
topology: tpu7x:2x2x1
jax: 0.10.0
libtpu: 0.0.40
codegen_flags: <defaults>
</compile_context>

<pallas_src>
import jax
import jax.numpy as jnp
from jax.experimental import pallas as pl
from jax.experimental.pallas import tpu as pltpu

_LANE = 128          # TPU lane width
_MAX_TILE = 2048     # points per grid step (multiple of 128); v7x-VMEM-safe


def _cdiv(a, b):
    return (a + b - 1) // b


def _round_up(a, b):
    return _cdiv(a, b) * b


def _chain_terms(v0, v1, v2, o):
    """Per-chain (1, T) angle ingredients from stacked (6, T) displacement rows.

    Rows [o, o+3) of v* hold x/y/z of one chain's displacement vectors at
    positions j (v0), j+1 (v1), j+2 (v2).  Explicit component arithmetic only:
    no cross-sublane (XLU) reductions.
    """
    v0x, v0y, v0z = v0[o:o + 1], v0[o + 1:o + 2], v0[o + 2:o + 3]
    v1x, v1y, v1z = v1[o:o + 1], v1[o + 1:o + 2], v1[o + 2:o + 3]
    v2x, v2y, v2z = v2[o:o + 1], v2[o + 1:o + 2], v2[o + 2:o + 3]

    dot = v0x * v1x + v0y * v1y + v0z * v1z          # v[j] . v[j+1]
    naa = v0x * v0x + v0y * v0y + v0z * v0z          # |v[j]|^2
    nbb = v1x * v1x + v1y * v1y + v1z * v1z          # |v[j+1]|^2

    # c0 = v[j] x v[j+1] ,  c1 = v[j+1] x v[j+2]
    c0x = v0y * v1z - v0z * v1y
    c0y = v0z * v1x - v0x * v1z
    c0z = v0x * v1y - v0y * v1x
    c1x = v1y * v2z - v1z * v2y
    c1y = v1z * v2x - v1x * v2z
    c1z = v1x * v2y - v1y * v2x

    dot_cross = c0x * c1x + c0y * c1y + c0z * c1z    # c[j] . c[j+1]
    dot_vec = v0x * c1x + v0y * c1y + v0z * c1z      # v[j] . c[j+1]
    return dot, naa * nbb, dot_cross, dot_vec


def _make_kernel(n_points, tile):
    def kernel(cur_ref, nxt_ref, bond_out_ref, tors_out_ref):
        i = pl.program_id(0)

        cur = cur_ref[...]                                      # (6, tile)
        nxt = nxt_ref[...]                                      # (6, tile) halo

        # Three shifted copies of the raw points; everything downstream is
        # positional (consolidates all the old ':-1' / '1:' / ':-2' slices).
        cat = jnp.concatenate([cur, nxt[:, :_LANE]], axis=1)    # (6, tile+128)
        p0 = cur
        p1 = cat[:, 1:tile + 1]
        p2 = cat[:, 2:tile + 2]
        p3 = cat[:, 3:tile + 3]

        v0 = p1 - p0        # v[j]
        v1 = p2 - p1        # v[j+1]
        v2 = p3 - p2        # v[j+2]

        dot_p, nprod_p, dc_p, dv_p = _chain_terms(v0, v1, v2, 0)   # pred chain
        dot_t, nprod_t, dc_t, dv_t = _chain_terms(v0, v1, v2, 3)   # target chain

        # Pack both chains on sublanes before each transcendental so the EUP
        # handles 2 (resp. 4) rows per push instead of one sparse (1, T) row.
        dots = jnp.concatenate([dot_p, dot_t], axis=0)              # (2, tile)
        nprod = jnp.concatenate([nprod_p, nprod_t], axis=0)         # (2, tile)

        # One sqrt (sqrt(naa*nbb) == sqrt(naa)*sqrt(nbb)) + one divide,
        # keeping torch's epsilon placement: dot / (|a||b| + 1e-8).
        x = dots / (jnp.sqrt(nprod) + 1e-8)
        # acos(x) = atan2(sqrt(1 - x^2), x); NaN for |x| > 1 exactly like
        # torch.acos (deliberately not clamped, to stay reference-faithful).
        s = jnp.sqrt(1.0 - x * x)

        # Single dense atan2 over (4, tile): rows 0/1 = bond (pred/target),
        # rows 2/3 = torsion (pred/target).
        ynum = jnp.concatenate([s, dc_p, dc_t], axis=0)             # (4, tile)
        xden = jnp.concatenate([x, dv_p, dv_t], axis=0)             # (4, tile)
        ang = jnp.arctan2(ynum, xden)

        d_bond = ang[0:1] - ang[1:2]
        d_tors = ang[2:3] - ang[3:4]

        # Mask lanes past the valid angle ranges (tail of last real tile and
        # zero padding).  jnp.where is a select, so masked-lane garbage/NaN
        # cannot poison the sums.
        lane = jax.lax.broadcasted_iota(jnp.int32, (1, tile), 1)
        gidx = i * tile + lane
        bond_sq = jnp.where(gidx < n_points - 2, d_bond * d_bond, 0.0)
        tors_sq = jnp.where(gidx < n_points - 3, d_tors * d_tors, 0.0)

        # Per-tile partial sums, splatted over an (8, 128)-aligned block so the
        # grid axis stays "parallel" (no carried accumulator).
        bond_out_ref[...] = jnp.broadcast_to(jnp.sum(bond_sq), (8, _LANE))
        tors_out_ref[...] = jnp.broadcast_to(jnp.sum(tors_sq), (8, _LANE))

    return kernel


def angle_loss(pred_points, target_points, *, max_tile=_MAX_TILE):
    """pred_points, target_points: (N, 3) float32 -> scalar loss (f32)."""
    assert pred_points.shape == target_points.shape
    n = int(pred_points.shape[0])
    assert pred_points.shape[-1] == 3 and n >= 4

    # One-time layout prep: coord-major with both chains stacked on sublanes.
    # TODO(synk): production callers should keep points in this (6, N) layout
    # upstream so the transpose fuses into the producer instead of an extra
    # HBM read/write here.
    pred_t = jnp.asarray(pred_points, jnp.float32).T            # (3, N)
    tgt_t = jnp.asarray(target_points, jnp.float32).T           # (3, N)
    pts = jnp.concatenate([pred_t, tgt_t], axis=0)              # (6, N)

    n_angles = max(n - 2, 1)                                    # bond-angle count
    tile = int(min(max_tile, _round_up(n_angles, _LANE)))
    num_tiles = _cdiv(n_angles, tile)
    padded = (num_tiles + 1) * tile                             # +1 tile of halo
    pts = jnp.pad(pts, ((0, 0), (0, padded - n)))

    out_shape = jax.ShapeDtypeStruct((8, num_tiles * _LANE), jnp.float32)
    bond_part, tors_part = pl.pallas_call(
        _make_kernel(n, tile),
        out_shape=(out_shape, out_shape),
        grid_spec=pltpu.PrefetchScalarGridSpec(
            num_scalar_prefetch=0,
            grid=(num_tiles,),
            in_specs=[
                pl.BlockSpec((6, tile), lambda i: (0, i)),       # current tile
                pl.BlockSpec((6, tile), lambda i: (0, i + 1)),   # +1-tile halo
            ],
            out_specs=[
                pl.BlockSpec((8, _LANE), lambda i: (0, i)),
                pl.BlockSpec((8, _LANE), lambda i: (0, i)),
            ],
        ),
        compiler_params=pltpu.CompilerParams(
            dimension_semantics=("parallel",),    # independent tiles -> both TCs on v7x
            vmem_limit_bytes=32 * 1024 * 1024,
        ),
    )(pts, pts)

    bond_sse = jnp.sum(bond_part[0, ::_LANE])
    tors_sse = jnp.sum(tors_part[0, ::_LANE])
    return bond_sse / float(n - 2) + tors_sse / float(n - 3)


def _angle_loss_ref(pred_points, target_points):
    # pure-JAX reference mirroring the PyTorch module
    def angles(points):
        v = points[1:] - points[:-1]
        dot = jnp.sum(v[:-1] * v[1:], axis=-1)
        norms = jnp.linalg.norm(v[:-1], axis=-1) * jnp.linalg.norm(v[1:], axis=-1)
        bond = jnp.arccos(dot / (norms + 1e-8))
        cross = jnp.cross(v[:-1], v[1:])
        dot_cross = jnp.sum(cross[:-1] * cross[1:], axis=-1)
        dot_vectors = jnp.sum(v[:-2] * cross[1:], axis=-1)
        torsion = jnp.arctan2(dot_cross, dot_vectors)
        return bond, torsion

    pb, pt = angles(pred_points)
    tb, tt = angles(target_points)
    return jnp.mean((pb - tb) ** 2) + jnp.mean((pt - tt) ** 2)


if __name__ == "__main__":
    key = jax.random.PRNGKey(0)
    k1, k2, k3, k4 = jax.random.split(key, 4)

    # Small case matching the module's typical use: a single 16-point chain.
    N = 16
    pred_points = jax.random.normal(k1, (N, 3), dtype=jnp.float32)
    target_points = jax.random.normal(k2, (N, 3), dtype=jnp.float32)
    loss = jax.block_until_ready(angle_loss(pred_points, target_points))
    ref = jax.block_until_ready(_angle_loss_ref(pred_points, target_points))
    assert jnp.allclose(loss, ref, rtol=1e-4, atol=1e-4, equal_nan=True), (loss, ref)

    # Multi-tile case: exercises the cross-tile halo and tail masking.
    N2 = 3000
    pred2 = jax.random.normal(k3, (N2, 3), dtype=jnp.float32)
    tgt2 = jax.random.normal(k4, (N2, 3), dtype=jnp.float32)
    loss2 = jax.block_until_ready(angle_loss(pred2, tgt2, max_tile=1024))
    ref2 = jax.block_until_ready(_angle_loss_ref(pred2, tgt2))
    assert jnp.allclose(loss2, ref2, rtol=1e-4, atol=1e-4, equal_nan=True), (loss2, ref2)

    print("KERNEL_OK")
</pallas_src>

<mosaic_0001>
module attributes {stable_mosaic.version = 11 : i64} {
  func.func @kernel(%arg0: i32, %arg1: memref<6x128xf32, #tpu.memory_space<vmem>>, %arg2: memref<6x128xf32, #tpu.memory_space<vmem>>, %arg3: memref<8x128xf32, #tpu.memory_space<vmem>>, %arg4: memref<8x128xf32, #tpu.memory_space<vmem>>) attributes {dimension_semantics = [#tpu.dimension_semantics<parallel>], iteration_bounds = array<i64: 1>, scalar_prefetch = 0 : i64, scratch_operands = 0 : i64, tpu.core_type = #tpu.core_type<tc>, window_params = [{transform_indices = @transform_0, window_bounds = array<i64: 6, 128>}, {transform_indices = @transform_1, window_bounds = array<i64: 6, 128>}, {transform_indices = @transform_2, window_bounds = array<i64: 8, 128>}, {transform_indices = @transform_3, window_bounds = array<i64: 8, 128>}]} {
    %c0 = arith.constant 0 : index
    %c0_0 = arith.constant 0 : index
    %0 = vector.load %arg1[%c0, %c0_0] : memref<6x128xf32, #tpu.memory_space<vmem>>, vector<6x128xf32>
    %c0_1 = arith.constant 0 : index
    %c0_2 = arith.constant 0 : index
    %1 = vector.load %arg2[%c0_1, %c0_2] : memref<6x128xf32, #tpu.memory_space<vmem>>, vector<6x128xf32>
    %2 = tpu.concatenate %0, %1 in 1 : vector<6x128xf32>, vector<6x128xf32> -> vector<6x256xf32>
    %3 = vector.extract_strided_slice %2 {offsets = [0, 1], sizes = [6, 128], strides = [1, 1]} : vector<6x256xf32> to vector<6x128xf32>
    %4 = vector.extract_strided_slice %2 {offsets = [0, 2], sizes = [6, 128], strides = [1, 1]} : vector<6x256xf32> to vector<6x128xf32>
    %5 = vector.extract_strided_slice %2 {offsets = [0, 3], sizes = [6, 128], strides = [1, 1]} : vector<6x256xf32> to vector<6x128xf32>
    %6 = arith.subf %3, %0 : vector<6x128xf32>
    %7 = arith.subf %4, %3 : vector<6x128xf32>
    %8 = arith.subf %5, %4 : vector<6x128xf32>
    %9 = vector.extract_strided_slice %6 {offsets = [0, 0], sizes = [1, 128], strides = [1, 1]} : vector<6x128xf32> to vector<1x128xf32>
    %10 = vector.extract_strided_slice %6 {offsets = [1, 0], sizes = [1, 128], strides = [1, 1]} : vector<6x128xf32> to vector<1x128xf32>
    %11 = vector.extract_strided_slice %6 {offsets = [2, 0], sizes = [1, 128], strides = [1, 1]} : vector<6x128xf32> to vector<1x128xf32>
    %12 = vector.extract_strided_slice %7 {offsets = [0, 0], sizes = [1, 128], strides = [1, 1]} : vector<6x128xf32> to vector<1x128xf32>
    %13 = vector.extract_strided_slice %7 {offsets = [1, 0], sizes = [1, 128], strides = [1, 1]} : vector<6x128xf32> to vector<1x128xf32>
    %14 = vector.extract_strided_slice %7 {offsets = [2, 0], sizes = [1, 128], strides = [1, 1]} : vector<6x128xf32> to vector<1x128xf32>
    %15 = vector.extract_strided_slice %8 {offsets = [0, 0], sizes = [1, 128], strides = [1, 1]} : vector<6x128xf32> to vector<1x128xf32>
    %16 = vector.extract_strided_slice %8 {offsets = [1, 0], sizes = [1, 128], strides = [1, 1]} : vector<6x128xf32> to vector<1x128xf32>
    %17 = vector.extract_strided_slice %8 {offsets = [2, 0], sizes = [1, 128], strides = [1, 1]} : vector<6x128xf32> to vector<1x128xf32>
    %18 = arith.mulf %9, %12 : vector<1x128xf32>
    %19 = arith.mulf %10, %13 : vector<1x128xf32>
    %20 = arith.addf %18, %19 : vector<1x128xf32>
    %21 = arith.mulf %11, %14 : vector<1x128xf32>
    %22 = arith.addf %20, %21 : vector<1x128xf32>
    %23 = arith.mulf %9, %9 : vector<1x128xf32>
    %24 = arith.mulf %10, %10 : vector<1x128xf32>
    %25 = arith.addf %23, %24 : vector<1x128xf32>
    %26 = arith.mulf %11, %11 : vector<1x128xf32>
    %27 = arith.addf %25, %26 : vector<1x128xf32>
    %28 = arith.mulf %12, %12 : vector<1x128xf32>
    %29 = arith.mulf %13, %13 : vector<1x128xf32>
    %30 = arith.addf %28, %29 : vector<1x128xf32>
    %31 = arith.mulf %14, %14 : vector<1x128xf32>
    %32 = arith.addf %30, %31 : vector<1x128xf32>
    %33 = arith.mulf %10, %14 : vector<1x128xf32>
    %34 = arith.mulf %11, %13 : vector<1x128xf32>
    %35 = arith.subf %33, %34 : vector<1x128xf32>
    %36 = arith.mulf %11, %12 : vector<1x128xf32>
    %37 = arith.mulf %9, %14 : vector<1x128xf32>
    %38 = arith.subf %36, %37 : vector<1x128xf32>
    %39 = arith.mulf %9, %13 : vector<1x128xf32>
    %40 = arith.mulf %10, %12 : vector<1x128xf32>
    %41 = arith.subf %39, %40 : vector<1x128xf32>
    %42 = arith.mulf %13, %17 : vector<1x128xf32>
    %43 = arith.mulf %14, %16 : vector<1x128xf32>
    %44 = arith.subf %42, %43 : vector<1x128xf32>
    %45 = arith.mulf %14, %15 : vector<1x128xf32>
    %46 = arith.mulf %12, %17 : vector<1x128xf32>
    %47 = arith.subf %45, %46 : vector<1x128xf32>
    %48 = arith.mulf %12, %16 : vector<1x128xf32>
    %49 = arith.mulf %13, %15 : vector<1x128xf32>
    %50 = arith.subf %48, %49 : vector<1x128xf32>
    %51 = arith.mulf %35, %44 : vector<1x128xf32>
    %52 = arith.mulf %38, %47 : vector<1x128xf32>
    %53 = arith.addf %51, %52 : vector<1x128xf32>
    %54 = arith.mulf %41, %50 : vector<1x128xf32>
    %55 = arith.addf %53, %54 : vector<1x128xf32>
    %56 = arith.mulf %9, %44 : vector<1x128xf32>
    %57 = arith.mulf %10, %47 : vector<1x128xf32>
    %58 = arith.addf %56, %57 : vector<1x128xf32>
    %59 = arith.mulf %11, %50 : vector<1x128xf32>
    %60 = arith.addf %58, %59 : vector<1x128xf32>
    %61 = arith.mulf %27, %32 : vector<1x128xf32>
    %62 = vector.extract_strided_slice %6 {offsets = [3, 0], sizes = [1, 128], strides = [1, 1]} : vector<6x128xf32> to vector<1x128xf32>
    %63 = vector.extract_strided_slice %6 {offsets = [4, 0], sizes = [1, 128], strides = [1, 1]} : vector<6x128xf32> to vector<1x128xf32>
    %64 = vector.extract_strided_slice %6 {offsets = [5, 0], sizes = [1, 128], strides = [1, 1]} : vector<6x128xf32> to vector<1x128xf32>
    %65 = vector.extract_strided_slice %7 {offsets = [3, 0], sizes = [1, 128], strides = [1, 1]} : vector<6x128xf32> to vector<1x128xf32>
    %66 = vector.extract_strided_slice %7 {offsets = [4, 0], sizes = [1, 128], strides = [1, 1]} : vector<6x128xf32> to vector<1x128xf32>
    %67 = vector.extract_strided_slice %7 {offsets = [5, 0], sizes = [1, 128], strides = [1, 1]} : vector<6x128xf32> to vector<1x128xf32>
    %68 = vector.extract_strided_slice %8 {offsets = [3, 0], sizes = [1, 128], strides = [1, 1]} : vector<6x128xf32> to vector<1x128xf32>
    %69 = vector.extract_strided_slice %8 {offsets = [4, 0], sizes = [1, 128], strides = [1, 1]} : vector<6x128xf32> to vector<1x128xf32>
    %70 = vector.extract_strided_slice %8 {offsets = [5, 0], sizes = [1, 128], strides = [1, 1]} : vector<6x128xf32> to vector<1x128xf32>
    %71 = arith.mulf %62, %65 : vector<1x128xf32>
    %72 = arith.mulf %63, %66 : vector<1x128xf32>
    %73 = arith.addf %71, %72 : vector<1x128xf32>
    %74 = arith.mulf %64, %67 : vector<1x128xf32>
    %75 = arith.addf %73, %74 : vector<1x128xf32>
    %76 = arith.mulf %62, %62 : vector<1x128xf32>
    %77 = arith.mulf %63, %63 : vector<1x128xf32>
    %78 = arith.addf %76, %77 : vector<1x128xf32>
    %79 = arith.mulf %64, %64 : vector<1x128xf32>
    %80 = arith.addf %78, %79 : vector<1x128xf32>
    %81 = arith.mulf %65, %65 : vector<1x128xf32>
    %82 = arith.mulf %66, %66 : vector<1x128xf32>
    %83 = arith.addf %81, %82 : vector<1x128xf32>
    %84 = arith.mulf %67, %67 : vector<1x128xf32>
    %85 = arith.addf %83, %84 : vector<1x128xf32>
    %86 = arith.mulf %63, %67 : vector<1x128xf32>
    %87 = arith.mulf %64, %66 : vector<1x128xf32>
    %88 = arith.subf %86, %87 : vector<1x128xf32>
    %89 = arith.mulf %64, %65 : vector<1x128xf32>
    %90 = arith.mulf %62, %67 : vector<1x128xf32>
    %91 = arith.subf %89, %90 : vector<1x128xf32>
    %92 = arith.mulf %62, %66 : vector<1x128xf32>
    %93 = arith.mulf %63, %65 : vector<1x128xf32>
    %94 = arith.subf %92, %93 : vector<1x128xf32>
    %95 = arith.mulf %66, %70 : vector<1x128xf32>
    %96 = arith.mulf %67, %69 : vector<1x128xf32>
    %97 = arith.subf %95, %96 : vector<1x128xf32>
    %98 = arith.mulf %67, %68 : vector<1x128xf32>
    %99 = arith.mulf %65, %70 : vector<1x128xf32>
    %100 = arith.subf %98, %99 : vector<1x128xf32>
    %101 = arith.mulf %65, %69 : vector<1x128xf32>
    %102 = arith.mulf %66, %68 : vector<1x128xf32>
    %103 = arith.subf %101, %102 : vector<1x128xf32>
    %104 = arith.mulf %88, %97 : vector<1x128xf32>
    %105 = arith.mulf %91, %100 : vector<1x128xf32>
    %106 = arith.addf %104, %105 : vector<1x128xf32>
    %107 = arith.mulf %94, %103 : vector<1x128xf32>
    %108 = arith.addf %106, %107 : vector<1x128xf32>
    %109 = arith.mulf %62, %97 : vector<1x128xf32>
    %110 = arith.mulf %63, %100 : vector<1x128xf32>
    %111 = arith.addf %109, %110 : vector<1x128xf32>
    %112 = arith.mulf %64, %103 : vector<1x128xf32>
    %113 = arith.addf %111, %112 : vector<1x128xf32>
    %114 = arith.mulf %80, %85 : vector<1x128xf32>
    %115 = tpu.concatenate %22, %75 in 0 : vector<1x128xf32>, vector<1x128xf32> -> vector<2x128xf32>
    %116 = tpu.concatenate %61, %114 in 0 : vector<1x128xf32>, vector<1x128xf32> -> vector<2x128xf32>
    %117 = math.sqrt %116 : vector<2x128xf32>
    %cst = arith.constant 9.99999993E-9 : f32
    %118 = vector.broadcast %cst : f32 to vector<2x128xf32>
    %119 = arith.addf %117, %118 : vector<2x128xf32>
    %120 = arith.divf %115, %119 : vector<2x128xf32>
    %121 = arith.mulf %120, %120 : vector<2x128xf32>
    %cst_3 = arith.constant 1.000000e+00 : f32
    %122 = vector.broadcast %cst_3 : f32 to vector<2x128xf32>
    %123 = arith.subf %122, %121 : vector<2x128xf32>
    %124 = math.sqrt %123 : vector<2x128xf32>
    %125 = tpu.concatenate %124, %55, %108 in 0 : vector<2x128xf32>, vector<1x128xf32>, vector<1x128xf32> -> vector<4x128xf32>
    %126 = tpu.concatenate %120, %60, %113 in 0 : vector<2x128xf32>, vector<1x128xf32>, vector<1x128xf32> -> vector<4x128xf32>
    %127 = math.atan2 %125, %126 : vector<4x128xf32>
    %128 = vector.extract_strided_slice %127 {offsets = [0, 0], sizes = [1, 128], strides = [1, 1]} : vector<4x128xf32> to vector<1x128xf32>
    %129 = vector.extract_strided_slice %127 {offsets = [1, 0], sizes = [1, 128], strides = [1, 1]} : vector<4x128xf32> to vector<1x128xf32>
    %130 = arith.subf %128, %129 : vector<1x128xf32>
    %131 = vector.extract_strided_slice %127 {offsets = [2, 0], sizes = [1, 128], strides = [1, 1]} : vector<4x128xf32> to vector<1x128xf32>
    %132 = vector.extract_strided_slice %127 {offsets = [3, 0], sizes = [1, 128], strides = [1, 1]} : vector<4x128xf32> to vector<1x128xf32>
    %133 = arith.subf %131, %132 : vector<1x128xf32>
    %134 = tpu.iota {dimensions = array<i32: 1>} : vector<1x128xi32>
    %c128_i32 = arith.constant 128 : i32
    %135 = arith.muli %arg0, %c128_i32 : i32
    %136 = vector.broadcast %135 : i32 to vector<1x128xi32>
    %137 = arith.addi %136, %134 : vector<1x128xi32>
    %c14_i32 = arith.constant 14 : i32
    %138 = vector.broadcast %c14_i32 : i32 to vector<1x128xi32>
    %139 = arith.cmpi slt, %137, %138 : vector<1x128xi32>
    %140 = arith.mulf %130, %130 : vector<1x128xf32>
    %cst_4 = arith.constant 0.000000e+00 : f32
    %141 = vector.broadcast %cst_4 : f32 to vector<1x128xf32>
    %142 = arith.select %139, %140, %141 : vector<1x128xi1>, vector<1x128xf32>
    %c13_i32 = arith.constant 13 : i32
    %143 = vector.broadcast %c13_i32 : i32 to vector<1x128xi32>
    %144 = arith.cmpi slt, %137, %143 : vector<1x128xi32>
    %145 = arith.mulf %133, %133 : vector<1x128xf32>
    %cst_5 = arith.constant 0.000000e+00 : f32
    %146 = vector.broadcast %cst_5 : f32 to vector<1x128xf32>
    %147 = arith.select %144, %145, %146 : vector<1x128xi1>, vector<1x128xf32>
    %148 = vector.shape_cast %142 : vector<1x128xf32> to vector<1x1x128xf32>
    %cst_6 = arith.constant dense<0.000000e+00> : vector<1xf32>
    %149 = vector.multi_reduction <add>, %148, %cst_6 [1, 2] : vector<1x1x128xf32> to vector<1xf32>
    %150 = vector.shape_cast %149 : vector<1xf32> to vector<1x1x1xf32>
    %151 = vector.extract %150[0, 0, 0] : f32 from vector<1x1x1xf32>
    %152 = vector.broadcast %151 : f32 to vector<8x128xf32>
    %c0_7 = arith.constant 0 : index
    %c0_8 = arith.constant 0 : index
    %153 = vector.load %arg3[%c0_7, %c0_8] : memref<8x128xf32, #tpu.memory_space<vmem>>, vector<8x128xf32>
    tpu.vector_store %arg3[%c0_7, %c0_8], %152 {strides = array<i32>} : memref<8x128xf32, #tpu.memory_space<vmem>>, vector<8x128xf32>,
    %154 = vector.shape_cast %147 : vector<1x128xf32> to vector<1x1x128xf32>
    %cst_9 = arith.constant dense<0.000000e+00> : vector<1xf32>
    %155 = vector.multi_reduction <add>, %154, %cst_9 [1, 2] : vector<1x1x128xf32> to vector<1xf32>
    %156 = vector.shape_cast %155 : vector<1xf32> to vector<1x1x1xf32>
    %157 = vector.extract %156[0, 0, 0] : f32 from vector<1x1x1xf32>
    %158 = vector.broadcast %157 : f32 to vector<8x128xf32>
    %c0_10 = arith.constant 0 : index
    %c0_11 = arith.constant 0 : index
    %159 = vector.load %arg4[%c0_10, %c0_11] : memref<8x128xf32, #tpu.memory_space<vmem>>, vector<8x128xf32>
    tpu.vector_store %arg4[%c0_10, %c0_11], %158 {strides = array<i32>} : memref<8x128xf32, #tpu.memory_space<vmem>>, vector<8x128xf32>,
    return
  }
  func.func @transform_0(%arg0: i32) -> (i32, i32) {
    %c0_i32 = arith.constant 0 : i32
    %c0_i32_0 = arith.constant 0 : i32
    return %c0_i32, %arg0 : i32, i32
  }
  func.func @transform_1(%arg0: i32) -> (i32, i32) {
    %c1_i32 = arith.constant 1 : i32
    %0 = arith.addi %arg0, %c1_i32 : i32
    %c0_i32 = arith.constant 0 : i32
    %c0_i32_0 = arith.constant 0 : i32
    return %c0_i32, %0 : i32, i32
  }
  func.func @transform_2(%arg0: i32) -> (i32, i32) {
    %c0_i32 = arith.constant 0 : i32
    %c0_i32_0 = arith.constant 0 : i32
    return %c0_i32, %arg0 : i32, i32
  }
  func.func @transform_3(%arg0: i32) -> (i32, i32) {
    %c0_i32 = arith.constant 0 : i32
    %c0_i32_0 = arith.constant 0 : i32
    return %c0_i32, %arg0 : i32, i32
  }
}

</mosaic_0001>

<llo_original>
// kernel: tpu_custom_call.1
$region0: #{tpu_custom_call.1}
  #allocation0 [shape = 'u32[]', space=smem, size = 0x4, offset = 0x4, fixed_abs, tag = 'smem constant byte address 0x4 - core index']
  #allocation1 [shape = 'u32[144,128]{1,0:T(1,128)}', space=vmem, size = 0x12000, scoped, tag = 'internal scratch']
  %s0 = inlined_call_operand.hbm [shape: f32[6,256], index: 0, kind: input, shape index: {}]
  %s1 = inlined_call_operand.hbm [shape: f32[6,256], index: 1, kind: input, shape index: {}]
  %s2 = inlined_call_operand.hbm [shape: f32[8,128], index: 2, kind: output, shape index: {0}]
  %s3 = inlined_call_operand.hbm [shape: f32[8,128], index: 3, kind: output, shape index: {1}]
  %4 = xla_tuple %s2, %s3
  %s5 = sld [smem:[#allocation0]]
  $region34: #{tpu_custom_call.1} parent=0
    _
  %s7 = ssub.s32 1, %s5
  %s8 = scalar_select 0, %s7, %s5
  $region1: #{tpu_custom_call.1} parent=0
    #allocation2 [shape = 'u8[4096]{0}', space=vmem, size = 0x1000, scoped, tag = 'input window, operand 0, single buffered']
    #allocation3 [shape = 's32[1]{0}', space=sflag, size = 0x4, scoped, tag = 'scoped memory for tpu_custom_call.1']
    #allocation4 [shape = 's32[1]{0}', space=sflag, size = 0x4, scoped, tag = 'scoped memory for tpu_custom_call.1']
    #allocation5 [shape = 'u8[4096]{0}', space=vmem, size = 0x1000, scoped, tag = 'input window, operand 1, single buffered']
    #allocation6 [shape = 's32[1]{0}', space=sflag, size = 0x4, scoped, tag = 'scoped memory for tpu_custom_call.1']
    #allocation7 [shape = 'u8[4096]{0}', space=vmem, size = 0x1000, scoped, tag = 'output window, operand 0, single buffered']
    #allocation8 [shape = 'u8[4096]{0}', space=vmem, size = 0x1000, scoped, tag = 'output window, operand 1, single buffered']
    #allocation9 [shape = 's32[1]{0}', space=sflag, size = 0x4, scoped, tag = 'scoped memory for tpu_custom_call.1']
    %9 = vsyncpa [#allocation3], 0
    %10 = vsyncpa [#allocation6], 0
    %11 = vsyncpa [#allocation4], 0
    %12 = vsyncpa [#allocation9], 0
    // Predicated region
    $region2: #{tpu_custom_call.1} parent=1 // pred_check
      _
    $region3: #{tpu_custom_call.1} parent=1 // pred_check_branch
      %14 = sbr.rel (0) target = $region5
    $region4: #{tpu_custom_call.1} parent=1 // pred_region
      %s16 = ssub.s32 128, 128
      %17 = vsyncadd [#allocation3], %s16
      %s19 = sshll.u32 [#allocation2], 4
      %s20 = int_to_ptr.vmem [resolvable:$true] %s19
      %22 = dma.hbm_to_vmem [thread:$0]  %s0, 128, %s20, [#allocation3]
    $region5: #{tpu_custom_call.1} parent=1 // pred_fallthru
      _
    // Predicated region
    $region6: #{tpu_custom_call.1} parent=1 // pred_check
      _
    $region7: #{tpu_custom_call.1} parent=1 // pred_check_branch
      %24 = sbr.rel (0) target = $region9
    $region8: #{tpu_custom_call.1} parent=1 // pred_region
      %s25 = sadd.s32 0, 1
      %s27 = ssub.s32 128, 128
      %28 = vsyncadd [#allocation6], %s27
      %s29 = smul.addr %s25, 128
      %s30 = scalar_lea.hbm %s1, %s29
      %s32 = sshll.u32 [#allocation5], 4
      %s33 = int_to_ptr.vmem [resolvable:$true] %s32
      %35 = dma.hbm_to_vmem [thread:$0]  %s30, 128, %s33, [#allocation6]
    $region9: #{tpu_custom_call.1} parent=1 // pred_fallthru
      _
    // Predicated region
    $region10: #{tpu_custom_call.1} parent=1 // pred_check
      _
    $region11: #{tpu_custom_call.1} parent=1 // pred_check_branch
      %37 = sbr.rel (0) target = $region13
    $region12: #{tpu_custom_call.1} parent=1 // pred_region
      %38 = dma.done [#allocation3], 128
    $region13: #{tpu_custom_call.1} parent=1 // pred_fallthru
      _
    // Predicated region
    $region14: #{tpu_custom_call.1} parent=1 // pred_check
      _
    $region15: #{tpu_custom_call.1} parent=1 // pred_check_branch
      %40 = sbr.rel (0) target = $region17
    $region16: #{tpu_custom_call.1} parent=1 // pred_region
      %41 = dma.done [#allocation6], 128
    $region17: #{tpu_custom_call.1} parent=1 // pred_fallthru
      _
    %s42 = sadd.s32 0, 1
    %v43 = vld [vmem:[#allocation2] sm:$0x3f]
    %v44 = vld [vmem:[#allocation5] sm:$0x3f]
    %46 = vrot.lane.b32.xlu0 %v43, 1
    %v47 = vpop.permute.xlu0 %46
    %v49 = vsub.f32 %v43, %v47
    %v50 = vsub.f32 %v44, %v47
    %52 = vrot.lane.b32.xlu0 %v44, 1
    %v53 = vpop.permute.xlu0 %52
    %vm54 = vcmask 7168
    %v55 = vsel %vm54, %v47, %v53
    %v57 = vsub.f32 %v44, %v55
    %60 = vrot.lane.b32.xlu0 %v49, 127
    %v61 = vpop.permute.xlu0 %60
    %62 = vrot.lane.b32.xlu0 %v57, 127
    %v63 = vpop.permute.xlu0 %62
    %vm64 = vcmask 1039360
    %v65 = vsel %vm64, %v61, %v63
    %v68 = vmul.f32 %v49, %v65
    %v69 = vmul.f32 %v50, %v63
    %v72 = vrot.slane %v68, 1
    %v73 = vrot.slane %v69, 1
    %v76 = vadd.f32 %v68, %v72
    %v77 = vadd.f32 %v69, %v73
    %v78 = vrot.slane %v68, 2
    %v79 = vrot.slane %v69, 2
    %v82 = vadd.f32 %v76, %v78
    %v83 = vadd.f32 %v77, %v79
    %v84 = vmul.f32 %v49, %v49
    %v85 = vmul.f32 %v50, %v50
    %v88 = vrot.slane %v84, 1
    %v89 = vrot.slane %v85, 1
    %v92 = vadd.f32 %v84, %v88
    %v93 = vadd.f32 %v85, %v89
    %v94 = vrot.slane %v84, 2
    %v95 = vrot.slane %v85, 2
    %v98 = vadd.f32 %v92, %v94
    %v99 = vadd.f32 %v93, %v95
    %v100 = vmul.f32 %v57, %v57
    %v102 = vrot.slane %v100, 1
    %v104 = vadd.f32 %v100, %v102
    %v105 = vrot.slane %v100, 2
    %v107 = vadd.f32 %v104, %v105
    %v108 = vrot.slane %v49, 1
    %v109 = vrot.slane %v57, 1
    %110 = vrot.lane.b32.xlu0 %v108, 127
    %v111 = vpop.permute.xlu0 %110
    %112 = vrot.lane.b32.xlu0 %v109, 127
    %v113 = vpop.permute.xlu0 %112
    %v114 = vsel %vm64, %v111, %v113
    %v117 = vmul.f32 %v49, %v114
    %v118 = vmul.f32 %v50, %v113
    %v119 = vrot.slane %v49, 7
    %v120 = vrot.slane %v57, 7
    %121 = vrot.lane.b32.xlu0 %v119, 127
    %v122 = vpop.permute.xlu0 %121
    %123 = vrot.lane.b32.xlu0 %v120, 127
    %v124 = vpop.permute.xlu0 %123
    %v125 = vsel %vm64, %v122, %v124
    %v128 = vmul.f32 %v49, %v125
    %v129 = vmul.f32 %v50, %v124
    %v132 = vrot.slane %v128, 1
    %v133 = vrot.slane %v129, 1
    %v136 = vsub.f32 %v117, %v132
    %v137 = vsub.f32 %v118, %v133
    %v138 = vrot.slane %v49, 6
    %v139 = vrot.slane %v57, 6
    %140 = vrot.lane.b32.xlu0 %v138, 127
    %v141 = vpop.permute.xlu0 %140
    %142 = vrot.lane.b32.xlu0 %v139, 127
    %v143 = vpop.permute.xlu0 %142
    %v144 = vsel %vm64, %v141, %v143
    %v147 = vmul.f32 %v49, %v144
    %v148 = vmul.f32 %v50, %v143
    %v149 = vrot.slane %v49, 2
    %v150 = vrot.slane %v57, 2
    %151 = vrot.lane.b32.xlu0 %v149, 127
    %v152 = vpop.permute.xlu0 %151
    %153 = vrot.lane.b32.xlu0 %v150, 127
    %v154 = vpop.permute.xlu0 %153
    %v155 = vsel %vm64, %v152, %v154
    %v158 = vmul.f32 %v49, %v155
    %v159 = vmul.f32 %v50, %v154
    %v162 = vrot.slane %v158, 6
    %v163 = vrot.slane %v159, 6
    %v166 = vsub.f32 %v147, %v162
    %v167 = vsub.f32 %v148, %v163
    %v168 = vmul.f32 %v57, %v113
    %v169 = vmul.f32 %v57, %v124
    %v171 = vrot.slane %v169, 1
    %v173 = vsub.f32 %v168, %v171
    %v174 = vmul.f32 %v57, %v143
    %v175 = vmul.f32 %v57, %v154
    %v177 = vrot.slane %v175, 6
    %v179 = vsub.f32 %v174, %v177
    %182 = vrot.lane.b32.xlu0 %v136, 127
    %v183 = vpop.permute.xlu0 %182
    %184 = vrot.lane.b32.xlu0 %v173, 127
    %v185 = vpop.permute.xlu0 %184
    %v186 = vsel %vm64, %v183, %v185
    %v189 = vmul.f32 %v136, %v186
    %v190 = vmul.f32 %v137, %v185
    %193 = vrot.lane.b32.xlu0 %v166, 127
    %v194 = vpop.permute.xlu0 %193
    %195 = vrot.lane.b32.xlu0 %v179, 127
    %v196 = vpop.permute.xlu0 %195
    %v197 = vsel %vm64, %v194, %v196
    %v200 = vmul.f32 %v166, %v197
    %v201 = vmul.f32 %v167, %v196
    %v204 = vrot.slane %v200, 1
    %v205 = vrot.slane %v201, 1
    %v208 = vadd.f32 %v189, %v204
    %v209 = vadd.f32 %v190, %v205
    %v212 = vrot.slane %v189, 7
    %v213 = vrot.slane %v190, 7
    %v216 = vadd.f32 %v208, %v212
    %v217 = vadd.f32 %v209, %v213
    %v218 = vrot.slane %v136, 1
    %v219 = vrot.slane %v173, 1
    %220 = vrot.lane.b32.xlu0 %v218, 127
    %v221 = vpop.permute.xlu0 %220
    %222 = vrot.lane.b32.xlu0 %v219, 127
    %v223 = vpop.permute.xlu0 %222
    %v224 = vsel %vm64, %v221, %v223
    %v227 = vmul.f32 %v49, %v224
    %v228 = vmul.f32 %v50, %v223
    %v229 = vrot.slane %v166, 1
    %v230 = vrot.slane %v179, 1
    %231 = vrot.lane.b32.xlu0 %v229, 127
    %v232 = vpop.permute.xlu0 %231
    %233 = vrot.lane.b32.xlu0 %v230, 127
    %v234 = vpop.permute.xlu0 %233
    %v235 = vsel %vm64, %v232, %v234
    %v238 = vmul.f32 %v49, %v235
    %v239 = vmul.f32 %v50, %v234
    %v242 = vrot.slane %v238, 1
    %v243 = vrot.slane %v239, 1
    %v246 = vadd.f32 %v227, %v242
    %v247 = vadd.f32 %v228, %v243
    %v248 = vrot.slane %v136, 6
    %v249 = vrot.slane %v173, 6
    %250 = vrot.lane.b32.xlu0 %v248, 127
    %v251 = vpop.permute.xlu0 %250
    %252 = vrot.lane.b32.xlu0 %v249, 127
    %v253 = vpop.permute.xlu0 %252
    %v254 = vsel %vm64, %v251, %v253
    %v257 = vmul.f32 %v49, %v254
    %v258 = vmul.f32 %v50, %v253
    %v261 = vrot.slane %v257, 2
    %v262 = vrot.slane %v258, 2
    %v265 = vadd.f32 %v246, %v261
    %v266 = vadd.f32 %v247, %v262
    %269 = vrot.lane.b32.xlu0 %v98, 127
    %v270 = vpop.permute.xlu0 %269
    %271 = vrot.lane.b32.xlu0 %v107, 127
    %v272 = vpop.permute.xlu0 %271
    %v273 = vsel %vm64, %v270, %v272
    %v276 = vmul.f32 %v98, %v273
    %v277 = vmul.f32 %v99, %v272
    %v280 = vrot.slane %v82, 2
    %v281 = vrot.slane %v83, 2
    %vm284 = vcmask 1040384
    %v285 = vsel %vm284, %v82, %v280
    %v286 = vsel %vm284, %v83, %v281
    %v289 = vrot.slane %v276, 2
    %v290 = vrot.slane %v277, 2
    %v293 = vsel %vm284, %v276, %v289
    %v294 = vsel %vm284, %v277, %v290
    %v295 = vrsqrt.pop %v293
    %v296 = vmul.f32 %v293, %v295
    %vm297 = vcmp.eq.f32.partialorder %v293, inf
    %v298 = vsel %vm297, %v293, %v296
    %vm299 = vcmp.eq.f32.partialorder %v293, 0.0
    %v300 = vand.u32 %v293, 2147483648
    %v301 = vsel %vm299, %v300, %v298
    %v302 = vrsqrt.pop %v294
    %v303 = vmul.f32 %v294, %v302
    %vm304 = vcmp.eq.f32.partialorder %v294, inf
    %v305 = vsel %vm304, %v294, %v303
    %vm306 = vcmp.eq.f32.partialorder %v294, 0.0
    %v307 = vand.u32 %v294, 2147483648
    %v308 = vsel %vm306, %v307, %v305
    %v309 = vadd.f32 %v301, 1e-08
    %v310 = vadd.f32 %v308, 1e-08
    %v311 = vrcp.pop %v309
    %v312 = vmul.f32 %v285, %v311
    %v313 = vrcp.pop %v310
    %v314 = vmul.f32 %v286, %v313
    %v315 = vmul.f32 %v312, %v312
    %v316 = vmul.f32 %v314, %v314
    %v317 = vsub.f32 1.0, %v315
    %v318 = vsub.f32 1.0, %v316
    %v319 = vrsqrt.pop %v317
    %v320 = vmul.f32 %v317, %v319
    %vm321 = vcmp.eq.f32.partialorder %v317, inf
    %v322 = vsel %vm321, %v317, %v320
    %vm323 = vcmp.eq.f32.partialorder %v317, 0.0
    %v324 = vand.u32 %v317, 2147483648
    %v325 = vsel %vm323, %v324, %v322
    %v326 = vrsqrt.pop %v318
    %v327 = vmul.f32 %v318, %v326
    %vm328 = vcmp.eq.f32.partialorder %v318, inf
    %v329 = vsel %vm328, %v318, %v327
    %vm330 = vcmp.eq.f32.partialorder %v318, 0.0
    %v331 = vand.u32 %v318, 2147483648
    %v332 = vsel %vm330, %v331, %v329
    %v335 = vrot.slane %v216, 7
    %v336 = vrot.slane %v217, 7
    %v339 = vrot.slane %v216, 1
    %v340 = vrot.slane %v217, 1
    %vm343 = vcmask 1041408
    %v344 = vsel %vm343, %v325, %v335
    %v345 = vsel %vm343, %v332, %v336
    %vm346 = vcmask 1042432
    %v347 = vsel %vm346, %v344, %v339
    %v348 = vsel %vm346, %v345, %v340
    %v351 = vrot.slane %v265, 6
    %v352 = vrot.slane %v266, 6
    %v355 = vsel %vm343, %v312, %v351
    %v356 = vsel %vm343, %v314, %v352
    %v357 = vsel %vm346, %v355, %v265
    %v358 = vsel %vm346, %v356, %v266
    %v359 = vand.u32 2147483647, %v357
    %v360 = vand.u32 2147483647, %v347
    %v361 = vmin.f32 %v359, %v360
    %v362 = vmax.f32 %v359, %v360
    %v363 = vrcp.pop %v362
    %v364 = vmul.f32 %v361, %v363
    %v365 = vmul.f32 %v364, %v364
    %v366 = vmul.f32 0.002785687, %v365
    %v367 = vadd.f32 %v366, -0.015866
    %v368 = vmul.f32 %v367, %v365
    %v369 = vadd.f32 %v368, 0.04247222
    %v370 = vmul.f32 %v369, %v365
    %v371 = vadd.f32 %v370, -0.074975304
    %v372 = vmul.f32 %v371, %v365
    %v373 = vadd.f32 %v372, 0.1064488
    %v374 = vmul.f32 %v373, %v365
    %v375 = vadd.f32 %v374, -0.14207031
    %v376 = vmul.f32 %v375, %v365
    %v377 = vadd.f32 %v376, 0.19993454
    %v378 = vmul.f32 %v377, %v365
    %v379 = vadd.f32 %v378, -0.33333147
    %v380 = vmul.f32 %v379, %v365
    %v381 = vmul.f32 %v380, %v364
    %v382 = vadd.f32 %v381, %v364
    %vm383 = vcmp.gt.f32.partialorder %v360, %v359
    %v384 = vsub.f32 1.5707964, %v382
    %v385 = vsel %vm383, %v384, %v382
    %vm386 = vcmp.lt.f32.partialorder %v357, 0.0
    %v387 = vsub.f32 3.1415927, %v385
    %v388 = vsel %vm386, %v387, %v385
    %vm389 = vcmp.lt.s32.totalorder %v357, 0
    %v390 = vsel %vm389, 3.1415927, 0.0
    %vm391 = vcmp.eq.f32.partialorder %v347, 0.0
    %v392 = vsel %vm391, %v390, %v388
    %vm393 = vcmp.ne.f32.partialorder %v357, %v357
    %vm394 = vcmp.ne.f32.partialorder %v347, %v347
    %vm395 = vmor %vm393, %vm394
    %v396 = vsel %vm395, nan, %v392
    %vm397 = vcmp.lt.f32.partialorder %v357, 0.0
    %v398 = vsel %vm397, 2.3561945, 0.7853982
    %vm399 = vcmp.eq.s32.totalorder %v359, inf
    %vm400 = vcmp.eq.s32.totalorder %v360, inf
    %vm401 = vmand %vm399, %vm400
    %v402 = vsel %vm401, %v398, %v396
    %v403 = vand.u32 2147483647, %v402
    %v404 = vand.u32 %v347, 2147483648
    %v405 = vor.u32 %v403, %v404
    %v406 = vand.u32 2147483647, %v358
    %v407 = vand.u32 2147483647, %v348
    %v408 = vmin.f32 %v406, %v407
    %v409 = vmax.f32 %v406, %v407
    %v410 = vrcp.pop %v409
    %v411 = vmul.f32 %v408, %v410
    %v412 = vmul.f32 %v411, %v411
    %v413 = vmul.f32 0.002785687, %v412
    %v414 = vadd.f32 %v413, -0.015866
    %v415 = vmul.f32 %v414, %v412
    %v416 = vadd.f32 %v415, 0.04247222
    %v417 = vmul.f32 %v416, %v412
    %v418 = vadd.f32 %v417, -0.074975304
    %v419 = vmul.f32 %v418, %v412
    %v420 = vadd.f32 %v419, 0.1064488
    %v421 = vmul.f32 %v420, %v412
    %v422 = vadd.f32 %v421, -0.14207031
    %v423 = vmul.f32 %v422, %v412
    %v424 = vadd.f32 %v423, 0.19993454
    %v425 = vmul.f32 %v424, %v412
    %v426 = vadd.f32 %v425, -0.33333147
    %v427 = vmul.f32 %v426, %v412
    %v428 = vmul.f32 %v427, %v411
    %v429 = vadd.f32 %v428, %v411
    %vm430 = vcmp.gt.f32.partialorder %v407, %v406
    %v431 = vsub.f32 1.5707964, %v429
    %v432 = vsel %vm430, %v431, %v429
    %vm433 = vcmp.lt.f32.partialorder %v358, 0.0
    %v434 = vsub.f32 3.1415927, %v432
    %v435 = vsel %vm433, %v434, %v432
    %vm436 = vcmp.lt.s32.totalorder %v358, 0
    %v437 = vsel %vm436, 3.1415927, 0.0
    %vm438 = vcmp.eq.f32.partialorder %v348, 0.0
    %v439 = vsel %vm438, %v437, %v435
    %vm440 = vcmp.ne.f32.partialorder %v358, %v358
    %vm441 = vcmp.ne.f32.partialorder %v348, %v348
    %vm442 = vmor %vm440, %vm441
    %v443 = vsel %vm442, nan, %v439
    %vm444 = vcmp.lt.f32.partialorder %v358, 0.0
    %v445 = vsel %vm444, 2.3561945, 0.7853982
    %vm446 = vcmp.eq.s32.totalorder %v406, inf
    %vm447 = vcmp.eq.s32.totalorder %v407, inf
    %vm448 = vmand %vm446, %vm447
    %v449 = vsel %vm448, %v445, %v443
    %v450 = vand.u32 2147483647, %v449
    %v451 = vand.u32 %v348, 2147483648
    %v452 = vor.u32 %v450, %v451
    %v455 = vrot.slane %v405, 1
    %v456 = vrot.slane %v452, 1
    %v459 = vsub.f32 %v405, %v455
    %v460 = vsub.f32 %v452, %v456
    %v461 = vlaneseq
    %v462 = vand.u32 %v461, 127
    %s463 = smul.u32 0, 128
    %v464 = vstv %s463
    %v465 = vadd.s32 %v464, %v462
    %vm466 = vcmp.lt.s32.totalorder %v465, 14
    %v467 = vmul.f32 %v459, %v459
    %v468 = vmul.f32 %v460, %v460
    %471 = vrot.lane.b32.xlu0 %v467, 127
    %v472 = vpop.permute.xlu0 %471
    %473 = vrot.lane.b32.xlu0 %v468, 127
    %v474 = vpop.permute.xlu0 %473
    %v475 = vsel %vm64, %v472, %v474
    %v477 = vsel %vm466, %v475, 0.0
    %vm478 = vcmp.lt.s32.totalorder %v465, 13
    %v479 = vrot.slane %v467, 2
    %v480 = vrot.slane %v468, 2
    %481 = vrot.lane.b32.xlu0 %v479, 127
    %v482 = vpop.permute.xlu0 %481
    %483 = vrot.lane.b32.xlu0 %v480, 127
    %v484 = vpop.permute.xlu0 %483
    %v485 = vsel %vm64, %v482, %v484
    %v487 = vsel %vm478, %v485, 0.0
    %v488 = vsel %vm284, %v477, 0.0
    %489 = vadd.xlane.f32.xlu0 %v488
    %v490 = vpop.xlane.xlu0 %489
    %v491 = vrot.slane %v490, 4
    %v492 = vadd.f32 %v490, %v491
    %v493 = vrot.slane %v492, 2
    %v494 = vadd.f32 %v492, %v493
    %v495 = vrot.slane %v494, 1
    %v496 = vadd.f32 %v494, %v495
    %s497 = vtos %v496
    %v498 = vstv %s497
    %499 = vst [vmem:[#allocation7] sm:$0xff] %v498
    %v500 = vsel %vm284, %v487, 0.0
    %501 = vadd.xlane.f32.xlu0 %v500
    %v502 = vpop.xlane.xlu0 %501
    %v503 = vrot.slane %v502, 4
    %v504 = vadd.f32 %v502, %v503
    %v505 = vrot.slane %v504, 2
    %v506 = vadd.f32 %v504, %v505
    %v507 = vrot.slane %v506, 1
    %v508 = vadd.f32 %v506, %v507
    %s509 = vtos %v508
    %v510 = vstv %s509
    %511 = vst [vmem:[#allocation8] sm:$0xff] %v510
    // Predicated region
    $region18: #{tpu_custom_call.1} parent=1 // pred_check
      _
    $region19: #{tpu_custom_call.1} parent=1 // pred_check_branch
      %513 = sbr.rel (0) target = $region21
    $region20: #{tpu_custom_call.1} parent=1 // pred_region
      %s515 = ssub.s32 128, 128
      %516 = vsyncadd [#allocation4], %s515
      %s518 = sshll.u32 [#allocation7], 4
      %s519 = int_to_ptr.vmem [resolvable:$true] %s518
      %521 = dma.vmem_to_hbm [thread:$0]  %s519, 128, %s2, [#allocation4]
    $region21: #{tpu_custom_call.1} parent=1 // pred_fallthru
      _
    // Predicated region
    $region22: #{tpu_custom_call.1} parent=1 // pred_check
      _
    $region23: #{tpu_custom_call.1} parent=1 // pred_check_branch
      %523 = sbr.rel (0) target = $region25
    $region24: #{tpu_custom_call.1} parent=1 // pred_region
      %s525 = ssub.s32 128, 128
      %526 = vsyncadd [#allocation9], %s525
      %s528 = sshll.u32 [#allocation8], 4
      %s529 = int_to_ptr.vmem [resolvable:$true] %s528
      %531 = dma.vmem_to_hbm [thread:$0]  %s529, 128, %s3, [#allocation9]
    $region25: #{tpu_custom_call.1} parent=1 // pred_fallthru
      _
    // Predicated region
    $region26: #{tpu_custom_call.1} parent=1 // pred_check
      _
    $region27: #{tpu_custom_call.1} parent=1 // pred_check_branch
      %533 = sbr.rel (0) target = $region29
    $region28: #{tpu_custom_call.1} parent=1 // pred_region
      %534 = dma.done [#allocation4], 128
    $region29: #{tpu_custom_call.1} parent=1 // pred_fallthru
      _
    // Predicated region
    $region30: #{tpu_custom_call.1} parent=1 // pred_check
      _
    $region31: #{tpu_custom_call.1} parent=1 // pred_check_branch
      %536 = sbr.rel (0) target = $region33
    $region32: #{tpu_custom_call.1} parent=1 // pred_region
      %537 = dma.done [#allocation9], 128
    $region33: #{tpu_custom_call.1} parent=1 // pred_fallthru
      _
    %538 = vsyncpa [#allocation3], 1
    %539 = vsyncpa [#allocation6], 1
    %540 = vsyncpa [#allocation4], 1
    %541 = vsyncpa [#allocation9], 1

</llo_original>
